<compile_context>
chip_gen: v5e
topology: v5e:2x2
jax: 0.10.0
libtpu: 0.0.40
codegen_flags: <defaults>
</compile_context>

<pallas_src>
import jax
import jax.numpy as jnp
from jax.experimental import pallas as pl
from jax.experimental.pallas import tpu as pltpu


# -----------------------------------------------------------------------------
# Kernel 1: weight standardization (per output channel, over (Cin, kh, kw)).
# Weight arrives pre-flattened as (kh*kw*Cin, Cout), Cout on lanes.
# -----------------------------------------------------------------------------
def _weight_std_kernel(w_ref, o_ref):
    w = w_ref[...]                                           # (K, Cout)
    mean = jnp.mean(w, axis=0, keepdims=True)                # (1, Cout)
    var = jnp.mean((w - mean) ** 2, axis=0, keepdims=True)   # biased variance
    o_ref[...] = (w - mean) * jax.lax.rsqrt(var + 1e-5)      # eps=1e-5 (fp32 path)


def _standardize_weight(w2d):
    return pl.pallas_call(
        _weight_std_kernel,
        out_shape=jax.ShapeDtypeStruct(w2d.shape, jnp.float32),
        grid=(1,),
        in_specs=[pl.BlockSpec(w2d.shape, lambda i: (0, 0))],
        out_specs=pl.BlockSpec(w2d.shape, lambda i: (0, 0)),
    )(w2d)


# -----------------------------------------------------------------------------
# Kernel 2: fused 3x3 conv (stride 1, pad 1) + GroupNorm + per-(B,C) affine
# (= GN affine merged with optional scale/shift) + SiLU.  One batch element
# per grid step.
# -----------------------------------------------------------------------------
def _make_block_kernel(H, W, Cin, Cout, KH=3, KW=3):
    def kernel(xp_ref, w_ref, bc_ref, eg_ref, eb_ref, gm_ref, o_ref):
        # xp_ref: (1, H+2, W+2, Cin) padded input   w_ref : (KH*KW, Cin, Cout)
        # bc_ref: (1, Cout) group-centered conv bias
        # eg/eb : (1, 1, Cout) effective per-(batch,channel) affine
        # gm_ref: (Cout, Cout) group-averaging matrix (divides by cg*H*W)
        # o_ref : (1, H*W, Cout)
        acc = None
        for dy in range(KH):                  # 3x3 conv as 9 shifted matmuls
            for dx in range(KW):
                patch = xp_ref[0, dy:dy + H, dx:dx + W, :].reshape(H * W, Cin)
                t = jnp.dot(patch, w_ref[dy * KW + dx],
                            preferred_element_type=jnp.float32)
                acc = t if acc is None else acc + t

        # GroupNorm statistics.  Per-group mean/var broadcast back per channel
        # via a (1,C)x(C,C) group-averaging matmul -> tensor stays lane-dense.
        # Conv bias is folded in as a group-centered offset (exact rewrite of
        # "add bias, then subtract group mean").
        s = jnp.sum(acc, axis=0, keepdims=True)                         # (1, Cout)
        mean = jnp.dot(s, gm_ref[...], preferred_element_type=jnp.float32)
        d = acc + (bc_ref[...] - mean)                                  # (HW, Cout)
        ss = jnp.sum(d * d, axis=0, keepdims=True)                      # (1, Cout)
        var = jnp.dot(ss, gm_ref[...], preferred_element_type=jnp.float32)

        # Single fused per-pixel affine: rsqrt * gamma_eff folded into one
        # (1, Cout) coefficient before the broadcast.
        coef = jax.lax.rsqrt(var + 1e-5) * eg_ref[0]                    # (1, Cout)
        y = d * coef + eb_ref[0]
        y = y * (1.0 / (1.0 + jnp.exp(-y)))                             # SiLU
        o_ref[0] = y.astype(o_ref.dtype)      # single full-width slab store
    return kernel


def block_forward(x, conv_w, conv_b, gn_w, gn_b, *, groups=8, scale_shift=None):
    """Pallas `Block.forward`.

    x: (B, Cin, H, W); conv_w: (Cout, Cin, 3, 3); conv_b/gn_w/gn_b: (Cout,).
    scale_shift: optional (scale, shift), each reshapeable to (B, Cout).
    Returns (B, Cout, H, W), matching the PyTorch module's layout.
    """
    B, Cin, H, W = x.shape
    Cout, Cin_w, KH, KW = conv_w.shape
    assert Cin_w == Cin and (KH, KW) == (3, 3)
    assert Cout % groups == 0
    cg = Cout // groups

    x = x.astype(jnp.float32)
    conv_w = conv_w.astype(jnp.float32)
    conv_b = conv_b.astype(jnp.float32)
    gn_w = gn_w.astype(jnp.float32)
    gn_b = gn_b.astype(jnp.float32)

    # ---- batch-invariant prep (hoisted out of the per-batch grid) -----------
    # (Cout, Cin, 3, 3) -> (3, 3, Cin, Cout) -> (9*Cin, Cout), rows ordered
    # (dy, dx, ci), Cout on lanes.  Standardize, then expose taps on a leading
    # axis so the kernel's per-tap slice is a free static index.
    w2d = jnp.transpose(conv_w, (2, 3, 1, 0)).reshape(KH * KW * Cin, Cout)
    w_std = _standardize_weight(w2d).reshape(KH * KW, Cin, Cout)

    # Group-centered conv bias: (acc + b) - groupmean(acc + b)
    #                         == (acc - groupmean(acc)) + (b - groupmean(b)).
    b_g = conv_b.reshape(groups, cg)
    b_centered = (b_g - jnp.mean(b_g, axis=1, keepdims=True)).reshape(1, Cout)

    # Group-averaging matrix (applied to per-channel sums over H*W).
    gidx = jnp.arange(Cout) // cg
    gmat = (gidx[:, None] == gidx[None, :]).astype(jnp.float32) / (cg * H * W)

    # Fold GN affine and optional scale/shift into one per-(batch,channel)
    # affine:  (yhat*gamma + beta)*(scale+1) + shift
    #        == yhat*[gamma*(scale+1)] + [beta*(scale+1) + shift].
    if scale_shift is None:
        eff_g = jnp.broadcast_to(gn_w.reshape(1, 1, Cout), (B, 1, Cout))
        eff_b = jnp.broadcast_to(gn_b.reshape(1, 1, Cout), (B, 1, Cout))
    else:
        sc, sh = scale_shift
        sc = jnp.reshape(sc.astype(jnp.float32), (B, Cout))
        sh = jnp.reshape(sh.astype(jnp.float32), (B, Cout))
        eff_g = (gn_w.reshape(1, Cout) * (sc + 1.0))[:, None, :]
        eff_b = (gn_b.reshape(1, Cout) * (sc + 1.0) + sh)[:, None, :]

    # NCHW -> padded NHWC (channels on the lane axis).
    x_nhwc = jnp.transpose(x, (0, 2, 3, 1))
    x_pad = jnp.pad(x_nhwc, ((0, 0), (1, 1), (1, 1), (0, 0)))

    kernel = _make_block_kernel(H, W, Cin, Cout, KH, KW)
    out = pl.pallas_call(
        kernel,
        out_shape=jax.ShapeDtypeStruct((B, H * W, Cout), jnp.float32),
        grid=(B,),
        in_specs=[
            pl.BlockSpec((1, H + 2, W + 2, Cin), lambda b: (b, 0, 0, 0)),
            pl.BlockSpec((KH * KW, Cin, Cout), lambda b: (0, 0, 0)),
            pl.BlockSpec((1, Cout), lambda b: (0, 0)),
            pl.BlockSpec((1, 1, Cout), lambda b: (b, 0, 0)),
            pl.BlockSpec((1, 1, Cout), lambda b: (b, 0, 0)),
            pl.BlockSpec((Cout, Cout), lambda b: (0, 0)),
        ],
        out_specs=pl.BlockSpec((1, H * W, Cout), lambda b: (b, 0, 0)),
        compiler_params=pltpu.CompilerParams(
            dimension_semantics=("parallel",)),
    )(x_pad, w_std, b_centered, eff_g, eff_b, gmat)

    # (B, H*W, Cout) -> (B, Cout, H, W) to match PyTorch.
    return jnp.transpose(out.reshape(B, H, W, Cout), (0, 3, 1, 2))


# -----------------------------------------------------------------------------
# Pure-JAX reference (mirrors the PyTorch module).
# -----------------------------------------------------------------------------
def _reference_block(x, conv_w, conv_b, gn_w, gn_b, *, groups=8, scale_shift=None):
    eps = 1e-5
    mean = jnp.mean(conv_w, axis=(1, 2, 3), keepdims=True)
    var = jnp.var(conv_w, axis=(1, 2, 3), keepdims=True)
    w_n = (conv_w - mean) * jax.lax.rsqrt(var + eps)
    y = jax.lax.conv_general_dilated(
        x, w_n, window_strides=(1, 1), padding=((1, 1), (1, 1)),
        dimension_numbers=("NCHW", "OIHW", "NCHW"))
    y = y + conv_b.reshape(1, -1, 1, 1)
    B, C, H, W = y.shape
    g = y.reshape(B, groups, C // groups, H, W)
    gm = jnp.mean(g, axis=(2, 3, 4), keepdims=True)
    gv = jnp.var(g, axis=(2, 3, 4), keepdims=True)
    g = (g - gm) * jax.lax.rsqrt(gv + 1e-5)
    y = g.reshape(B, C, H, W) * gn_w.reshape(1, -1, 1, 1) + gn_b.reshape(1, -1, 1, 1)
    if scale_shift is not None:
        scale, shift = scale_shift
        y = y * (scale + 1.0) + shift
    return y * jax.nn.sigmoid(y)


if __name__ == "__main__":
    key = jax.random.PRNGKey(0)
    k1, k2, k3, k4, k5, k6, k7 = jax.random.split(key, 7)
    B, Cin, Cout, H, W, G = 2, 4, 32, 16, 16, 8

    x = jax.random.normal(k1, (B, Cin, H, W), jnp.float32)
    conv_w = 0.1 * jax.random.normal(k2, (Cout, Cin, 3, 3), jnp.float32)
    conv_b = 0.1 * jax.random.normal(k3, (Cout,), jnp.float32)
    gn_w = 1.0 + 0.1 * jax.random.normal(k4, (Cout,), jnp.float32)
    gn_b = 0.1 * jax.random.normal(k5, (Cout,), jnp.float32)
    scale = 0.1 * jax.random.normal(k6, (B, Cout, 1, 1), jnp.float32)
    shift = 0.1 * jax.random.normal(k7, (B, Cout, 1, 1), jnp.float32)

    # Path 1: with scale_shift (time-embedding modulation).
    out = block_forward(x, conv_w, conv_b, gn_w, gn_b, groups=G,
                        scale_shift=(scale, shift))
    out = jax.block_until_ready(out)
    ref = _reference_block(x, conv_w, conv_b, gn_w, gn_b, groups=G,
                           scale_shift=(scale, shift))
    assert out.shape == (B, Cout, H, W), out.shape
    assert jnp.allclose(out, ref, atol=1e-4, rtol=1e-4), \
        float(jnp.max(jnp.abs(out - ref)))

    # Path 2: scale_shift=None.
    out2 = jax.block_until_ready(
        block_forward(x, conv_w, conv_b, gn_w, gn_b, groups=G))
    ref2 = _reference_block(x, conv_w, conv_b, gn_w, gn_b, groups=G)
    assert jnp.allclose(out2, ref2, atol=1e-4, rtol=1e-4), \
        float(jnp.max(jnp.abs(out2 - ref2)))

    print("KERNEL_OK")
</pallas_src>

<mosaic_0001>
module attributes {stable_mosaic.version = 11 : i64} {
  func.func @_weight_std_kernel(%arg0: i32, %arg1: memref<36x32xf32, #tpu.memory_space<vmem>>, %arg2: memref<36x32xf32, #tpu.memory_space<vmem>>) attributes {dimension_semantics = [#tpu.dimension_semantics<arbitrary>], iteration_bounds = array<i64: 1>, scalar_prefetch = 0 : i64, scratch_operands = 0 : i64, tpu.core_type = #tpu.core_type<tc>, window_params = [{pipeline_mode = #tpu.pipeline_mode<synchronous>, transform_indices = @transform_0, window_bounds = array<i64: 36, 32>}, {pipeline_mode = #tpu.pipeline_mode<synchronous>, transform_indices = @transform_1, window_bounds = array<i64: 36, 32>}]} {
    %c0 = arith.constant 0 : index
    %c0_0 = arith.constant 0 : index
    %0 = vector.load %arg1[%c0, %c0_0] : memref<36x32xf32, #tpu.memory_space<vmem>>, vector<36x32xf32>
    %cst = arith.constant dense<0.000000e+00> : vector<32xf32>
    %1 = vector.multi_reduction <add>, %0, %cst [0] : vector<36x32xf32> to vector<32xf32>
    %2 = vector.shape_cast %1 : vector<32xf32> to vector<1x32xf32>
    %cst_1 = arith.constant 3.600000e+01 : f32
    %3 = vector.broadcast %cst_1 : f32 to vector<1x32xf32>
    %4 = arith.divf %2, %3 : vector<1x32xf32>
    %5 = vector.broadcast %4 : vector<1x32xf32> to vector<36x32xf32>
    %6 = arith.subf %0, %5 : vector<36x32xf32>
    %7 = arith.mulf %6, %6 : vector<36x32xf32>
    %cst_2 = arith.constant dense<0.000000e+00> : vector<32xf32>
    %8 = vector.multi_reduction <add>, %7, %cst_2 [0] : vector<36x32xf32> to vector<32xf32>
    %9 = vector.shape_cast %8 : vector<32xf32> to vector<1x32xf32>
    %cst_3 = arith.constant 3.600000e+01 : f32
    %10 = vector.broadcast %cst_3 : f32 to vector<1x32xf32>
    %11 = arith.divf %9, %10 : vector<1x32xf32>
    %12 = vector.broadcast %4 : vector<1x32xf32> to vector<36x32xf32>
    %13 = arith.subf %0, %12 : vector<36x32xf32>
    %cst_4 = arith.constant 9.99999974E-6 : f32
    %14 = vector.broadcast %cst_4 : f32 to vector<1x32xf32>
    %15 = arith.addf %11, %14 : vector<1x32xf32>
    %16 = math.rsqrt %15 : vector<1x32xf32>
    %17 = vector.broadcast %16 : vector<1x32xf32> to vector<36x32xf32>
    %18 = arith.mulf %13, %17 : vector<36x32xf32>
    %c0_5 = arith.constant 0 : index
    %c0_6 = arith.constant 0 : index
    %19 = vector.load %arg2[%c0_5, %c0_6] : memref<36x32xf32, #tpu.memory_space<vmem>>, vector<36x32xf32>
    tpu.vector_store %arg2[%c0_5, %c0_6], %18 {strides = array<i32>} : memref<36x32xf32, #tpu.memory_space<vmem>>, vector<36x32xf32>,
    return
  }
  func.func @transform_0(%arg0: i32) -> (i32, i32) {
    %c0_i32 = arith.constant 0 : i32
    %c0_i32_0 = arith.constant 0 : i32
    %c0_i32_1 = arith.constant 0 : i32
    return %c0_i32, %c0_i32_0 : i32, i32
  }
  func.func @transform_1(%arg0: i32) -> (i32, i32) {
    %c0_i32 = arith.constant 0 : i32
    %c0_i32_0 = arith.constant 0 : i32
    %c0_i32_1 = arith.constant 0 : i32
    return %c0_i32, %c0_i32_0 : i32, i32
  }
}

</mosaic_0001>

<llo_original>
// kernel: tpu_custom_call.1
$region0: #{tpu_custom_call.1}
  #allocation0 [shape = 'u32[]', space=smem, size = 0x4, offset = 0x4, fixed_abs, tag = 'smem constant byte address 0x4 - core index']
  #allocation1 [shape = 'u32[72,128]{1,0:T(1,128)}', space=vmem, size = 0x9000, scoped, tag = 'internal scratch']
  %s0 = inlined_call_operand.vmem [shape: f32[36,32], index: 0, kind: input, shape index: {}]
  %s1 = inlined_call_operand.vmem [shape: f32[36,32], index: 1, kind: output, shape index: {}]
  %s2 = sld [smem:[#allocation0]]
  $region14: #{tpu_custom_call.1} parent=0
    _
  %s4 = ssub.s32 1, %s2
  %s5 = scalar_select 0, %s4, %s2
  // Predicated region
  $region2: #{tpu_custom_call.1} parent=0 // pred_check
    _
  $region3: #{tpu_custom_call.1} parent=0 // pred_check_branch
    %7 = sbr.rel (0) target = $region5
  $region4: #{tpu_custom_call.1} parent=0 // pred_region
    _
  $region5: #{tpu_custom_call.1} parent=0 // pred_fallthru
    _
  %v8 = vld [vmem:[%s0] sm:$0xff]
  %v9 = vld [vmem:[%s0 + $0x8] sm:$0xff]
  %v10 = vld [vmem:[%s0 + $0x10] sm:$0xff]
  %v11 = vld [vmem:[%s0 + $0x18] sm:$0xff]
  %v12 = vld [vmem:[%s0 + $0x20] sm:$0xf]
  %vm13 = vcmask 261120
  %v14 = vsel %vm13, %v8, 0.0
  %v15 = vsel %vm13, %v9, 0.0
  %v16 = vadd.f32 %v14, %v15
  %v17 = vsel %vm13, %v10, 0.0
  %v18 = vadd.f32 %v16, %v17
  %v19 = vsel %vm13, %v11, 0.0
  %v20 = vadd.f32 %v18, %v19
  %vm21 = vcmask 257024
  %v22 = vsel %vm21, %v12, 0.0
  %v23 = vadd.f32 %v20, %v22
  %v24 = vrot.slane %v23, 4
  %v25 = vadd.f32 %v23, %v24
  %v26 = vrot.slane %v25, 2
  %v27 = vadd.f32 %v25, %v26
  %v28 = vrot.slane %v27, 1
  %v29 = vadd.f32 %v27, %v28
  %v30 = vrcp.pop 36.0
  %v31 = vmul.f32 36.0, %v30
  %v32 = vsub.f32 1.0, %v31
  %v33 = vmul.f32 %v30, %v32
  %v34 = vadd.f32 %v30, %v33
  %vm35 = vweird.f32 %v30
  %v36 = vsel %vm35, %v30, %v34
  %v37 = vmul.f32 %v29, %v36
  %v38 = vsub.f32 %v8, %v37
  %v39 = vsub.f32 %v9, %v37
  %v40 = vsub.f32 %v10, %v37
  %v41 = vsub.f32 %v11, %v37
  %v42 = vsub.f32 %v12, %v37
  %v43 = vmul.f32 %v38, %v38
  %v44 = vmul.f32 %v39, %v39
  %v45 = vmul.f32 %v40, %v40
  %v46 = vmul.f32 %v41, %v41
  %v47 = vmul.f32 %v42, %v42
  %v48 = vsel %vm13, %v43, 0.0
  %v49 = vsel %vm13, %v44, 0.0
  %v50 = vadd.f32 %v48, %v49
  %v51 = vsel %vm13, %v45, 0.0
  %v52 = vadd.f32 %v50, %v51
  %v53 = vsel %vm13, %v46, 0.0
  %v54 = vadd.f32 %v52, %v53
  %v55 = vsel %vm21, %v47, 0.0
  %v56 = vadd.f32 %v54, %v55
  %v57 = vrot.slane %v56, 4
  %v58 = vadd.f32 %v56, %v57
  %v59 = vrot.slane %v58, 2
  %v60 = vadd.f32 %v58, %v59
  %v61 = vrot.slane %v60, 1
  %v62 = vadd.f32 %v60, %v61
  %v63 = vmul.f32 %v62, %v36
  %v64 = vadd.f32 %v63, 1e-05
  %v65 = vrsqrt.pop %v64
  %v66 = vmul.f32 %v65, %v64
  %v67 = vmul.f32 %v66, %v65
  %v68 = vmul.f32 0.5, %v67
  %v69 = vsub.f32 1.5, %v68
  %v70 = vmul.f32 %v65, %v69
  %vm71 = vweird.f32 %v64
  %vm72 = vweird.f32 %v65
  %vm73 = vmor %vm71, %vm72
  %v74 = vsel %vm73, %v65, %v70
  %v75 = vmul.f32 %v38, %v74
  %v76 = vmul.f32 %v39, %v74
  %v77 = vmul.f32 %v40, %v74
  %v78 = vmul.f32 %v41, %v74
  %v79 = vmul.f32 %v42, %v74
  %80 = vst.msk [vmem:[%s1] sm:$0xff] %vm13, %v75
  %81 = vst.msk [vmem:[%s1 + $0x8] sm:$0xff] %vm13, %v76
  %82 = vst.msk [vmem:[%s1 + $0x10] sm:$0xff] %vm13, %v77
  %83 = vst.msk [vmem:[%s1 + $0x18] sm:$0xff] %vm13, %v78
  %84 = vst.msk [vmem:[%s1 + $0x20] sm:$0xf] %vm21, %v79
  // Predicated region
  $region6: #{tpu_custom_call.1} parent=0 // pred_check
    _
  $region7: #{tpu_custom_call.1} parent=0 // pred_check_branch
    %86 = sbr.rel (0) target = $region9
  $region8: #{tpu_custom_call.1} parent=0 // pred_region
    _
  $region9: #{tpu_custom_call.1} parent=0 // pred_fallthru
    _
  // Predicated region
  $region10: #{tpu_custom_call.1} parent=0 // pred_check
    _
  $region11: #{tpu_custom_call.1} parent=0 // pred_check_branch
    %88 = sbr.rel (0) target = $region13
  $region12: #{tpu_custom_call.1} parent=0 // pred_region
    _
  $region13: #{tpu_custom_call.1} parent=0 // pred_fallthru
    _

</llo_original>
